<compile_context>
chip_gen: v5e
topology: v5e:2x2
jax: 0.10.0
libtpu: 0.0.40
codegen_flags: <defaults>
</compile_context>

<pallas_src>
import functools

import jax
import jax.numpy as jnp
import numpy as np
from jax import lax
from jax.experimental import pallas as pl
from jax.experimental.pallas import tpu as pltpu


# ----------------------------- VMEM / tiling policy ------------------------


def _vmem_capacity_bytes():
    try:
        return int(pltpu.get_tpu_info().vmem_capacity_bytes)
    except Exception:
        return 64 * 1024 * 1024  # conservative fallback: v7x per-TC VMEM


def _vmem_policy():
    cap = _vmem_capacity_bytes()
    if cap >= 96 * 1024 * 1024:
        # v5e / v6e: 128 MiB physical VMEM -> generous tile budget.
        return {
            "tile_budget": 44 * 1024 * 1024,
            "vmem_limit": 100 * 1024 * 1024,
            "col_cap": 16384,
        }
    # v7x: 64 MiB per TensorCore.
    return {
        "tile_budget": 24 * 1024 * 1024,
        "vmem_limit": 48 * 1024 * 1024,
        "col_cap": 8192,
    }


def _pick_hw_tile(hw, per_col_bytes, fixed_bytes, tile_budget, col_cap):
    """Largest HW lane tile (multiple of 128, or the full HW extent) whose
    double-buffered per-step bytes plus resident/fixed blocks fit the budget."""
    avail = tile_budget - fixed_bytes
    cap = (avail // max(per_col_bytes, 1)) // 128 * 128
    cap = max(128, min(cap, col_cap))
    if hw <= cap:
        return hw       # full-extent block: legal for any HW, no tail needed
    return cap          # multiple of 128; ragged tail handled via cdiv grid


# --------------------------------- kernels ---------------------------------


def _stats_kernel(x_ref, gram_ref, sum_ref, *, hw_total, t_hw, tiles_per_split,
                  needs_mask):
    """Accumulate per-(split, batch) Gram matrix (C_in, C_in) and channel sums
    (C_in, 1) of x over HW tiles.  Gram runs on the MXU; the small channel-sum
    reduce overlaps on the XLU slot."""
    j = pl.program_id(2)

    @pl.when(j == 0)
    def _():
        gram_ref[...] = jnp.zeros_like(gram_ref)
        sum_ref[...] = jnp.zeros_like(sum_ref)

    xb = x_ref[...]  # (C_in, t_hw)
    if needs_mask:
        # Zero lanes past the true HW extent (last tile of the last split).
        s = pl.program_id(0)
        col0 = (s * tiles_per_split + j) * t_hw
        lane = lax.broadcasted_iota(jnp.int32, xb.shape, dimension=1)
        xb = jnp.where(col0 + lane < hw_total, xb, jnp.zeros_like(xb))

    # G += x @ x^T : contract over the lane (HW) axis, f32 accumulation.
    gram_ref[...] += lax.dot_general(
        xb, xb, (((1,), (1,)), ((), ())), preferred_element_type=jnp.float32
    )
    sum_ref[...] += jnp.sum(xb.astype(jnp.float32), axis=1, keepdims=True)


def _conv_bn_relu_kernel(x_ref, w_ref, bias_ref, o_ref):
    """Fused 1x1 conv (BN scale pre-folded into W) + bias + ReLU.
    Output last dim = HW tile -> lane-dense stores."""
    y = jnp.dot(w_ref[...], x_ref[...], preferred_element_type=jnp.float32)
    o_ref[...] = jnp.maximum(y + bias_ref[...], 0.0).astype(o_ref.dtype)


# --------------------------------- wrapper ----------------------------------


def conv1x1_forward(x_nchw, weight, gamma, beta, eps=1e-5):
    """Matches PyTorch conv1x1.forward for a fresh module: Conv2d(1x1, bias=False)
    -> BatchNorm2d in training mode (biased batch statistics) -> ReLU."""
    # TODO(synk): stride > 1 and BatchNorm eval-mode (running stats) are not
    # implemented; the module defaults (stride=1, training-mode stats) are assumed.
    N, C_in, H, W = x_nchw.shape
    C_out = weight.shape[0]
    HW = H * W
    M_total = N * HW

    compute_dtype = x_nchw.dtype
    itemsize = jnp.dtype(compute_dtype).itemsize
    x = x_nchw.reshape(N, C_in, HW)           # free reshape, stays in NCHW order
    w2d = weight.reshape(C_out, C_in)
    w_f32 = w2d.astype(jnp.float32)

    policy = _vmem_policy()

    # --- kernel 1 tiling: only x streams; resident Gram block is counted -----
    stats_fixed = 2 * C_in * C_in * 4 + 2 * C_in * 4       # double-buffered f32 outs
    t_hw_stats = _pick_hw_tile(HW, 2 * C_in * itemsize, stats_fixed,
                               policy["tile_budget"], policy["col_cap"])
    hw_tiles_stats = pl.cdiv(HW, t_hw_stats)
    # Core-parallel split of the HW axis: lets both v7x TensorCores work on the
    # stats pass at small batch; harmless on single-TC parts.
    n_split = 2 if (N < 4 and hw_tiles_stats % 2 == 0 and hw_tiles_stats >= 2) else 1
    tiles_per_split = hw_tiles_stats // n_split
    needs_mask = (HW % t_hw_stats) != 0

    stats_kernel = functools.partial(
        _stats_kernel, hw_total=HW, t_hw=t_hw_stats,
        tiles_per_split=tiles_per_split, needs_mask=needs_mask)

    stats_cost = pl.CostEstimate(
        flops=2 * C_in * C_in * HW * N,
        transcendentals=0,
        bytes_accessed=N * C_in * HW * itemsize
        + n_split * N * (C_in * C_in + C_in) * 4,
    )

    gram_parts, sum_parts = pl.pallas_call(
        stats_kernel,
        out_shape=(
            jax.ShapeDtypeStruct((n_split, N, C_in, C_in), jnp.float32),
            jax.ShapeDtypeStruct((n_split, N, C_in, 1), jnp.float32),
        ),
        grid_spec=pltpu.PrefetchScalarGridSpec(
            num_scalar_prefetch=0,
            grid=(n_split, N, tiles_per_split),
            in_specs=[
                pl.BlockSpec((None, C_in, t_hw_stats),
                             lambda s, n, j: (n, 0, s * tiles_per_split + j)),
            ],
            out_specs=(
                pl.BlockSpec((None, None, C_in, C_in),
                             lambda s, n, j: (s, n, 0, 0)),   # resident accumulator
                pl.BlockSpec((None, None, C_in, 1),
                             lambda s, n, j: (s, n, 0, 0)),   # resident accumulator
            ),
        ),
        compiler_params=pltpu.CompilerParams(
            dimension_semantics=("parallel", "parallel", "arbitrary"),
            vmem_limit_bytes=policy["vmem_limit"],
        ),
        cost_estimate=stats_cost,
    )(x)

    # --- fold batch-norm (training-mode batch stats, biased variance) --------
    gram = jnp.sum(gram_parts, axis=(0, 1))                # (C_in, C_in)
    sum_x = jnp.sum(sum_parts, axis=(0, 1))[:, 0]          # (C_in,)
    sum_y = w_f32 @ sum_x                                   # (C_out,)
    sumsq_y = jnp.sum((w_f32 @ gram) * w_f32, axis=1)       # diag(W G W^T)
    mean = sum_y / M_total
    # NOTE: sumsq/M - mean^2 is cancellation-prone when var << mean^2; clamped.
    var = jnp.maximum(sumsq_y / M_total - mean * mean, 0.0)
    scale = gamma.astype(jnp.float32) * lax.rsqrt(var + eps)
    bias = (beta.astype(jnp.float32) - mean * scale).reshape(C_out, 1)
    # Fold BN scale into the conv weight (in f32, then cast) -> kernel-2
    # epilogue is just +bias and relu.
    w_folded = (scale.reshape(C_out, 1) * w_f32).astype(compute_dtype)

    # --- kernel 2 tiling: x in + out streamed, weight/bias resident ----------
    k2_fixed = 2 * C_out * C_in * itemsize + 2 * C_out * 4
    t_hw2 = _pick_hw_tile(HW, 2 * (C_in + C_out) * itemsize, k2_fixed,
                          policy["tile_budget"], policy["col_cap"])
    hw_tiles2 = pl.cdiv(HW, t_hw2)

    k2_cost = pl.CostEstimate(
        flops=2 * C_out * C_in * HW * N,
        transcendentals=0,
        bytes_accessed=N * C_in * HW * itemsize + C_out * C_in * itemsize
        + N * C_out * HW * itemsize,
    )

    out = pl.pallas_call(
        _conv_bn_relu_kernel,
        out_shape=jax.ShapeDtypeStruct((N, C_out, HW), compute_dtype),
        grid_spec=pltpu.PrefetchScalarGridSpec(
            num_scalar_prefetch=0,
            grid=(N, hw_tiles2),
            in_specs=[
                pl.BlockSpec((None, C_in, t_hw2), lambda n, j: (n, 0, j)),
                pl.BlockSpec((C_out, C_in), lambda n, j: (0, 0)),
                pl.BlockSpec((C_out, 1), lambda n, j: (0, 0)),
            ],
            out_specs=pl.BlockSpec((None, C_out, t_hw2), lambda n, j: (n, 0, j)),
        ),
        compiler_params=pltpu.CompilerParams(
            dimension_semantics=("parallel", "parallel"),
            vmem_limit_bytes=policy["vmem_limit"],
        ),
        cost_estimate=k2_cost,
    )(x, w_folded, bias)

    return out.reshape(N, C_out, H, W)


# -------------------------------- reference ---------------------------------


def conv1x1_reference(x_nchw, weight, gamma, beta, eps=1e-5):
    """Plain-JAX reference matching PyTorch semantics (training-mode BN)."""
    y = jnp.einsum(
        "nchw,oc->nohw",
        x_nchw.astype(jnp.float32),
        weight.reshape(weight.shape[0], weight.shape[1]).astype(jnp.float32),
    )
    mean = jnp.mean(y, axis=(0, 2, 3), keepdims=True)
    var = jnp.mean(jnp.square(y - mean), axis=(0, 2, 3), keepdims=True)
    yhat = (y - mean) * lax.rsqrt(var + eps)
    yhat = yhat * gamma.reshape(1, -1, 1, 1) + beta.reshape(1, -1, 1, 1)
    return jnp.maximum(yhat, 0.0)


if __name__ == "__main__":
    N, C_in, C_out, H, W = 2, 4, 8, 16, 16

    key = jax.random.PRNGKey(0)
    kx, kw, kg, kb = jax.random.split(key, 4)

    x = jax.random.normal(kx, (N, C_in, H, W), dtype=jnp.float32)
    # Conv2d(in_ch, out_ch, kernel_size=1, bias=False) weight: (out_ch, in_ch, 1, 1)
    weight = jax.random.normal(kw, (C_out, C_in, 1, 1), dtype=jnp.float32) * 0.5
    # BatchNorm2d(out_ch) affine params (deterministic, non-trivial)
    gamma = 1.0 + 0.1 * jax.random.normal(kg, (C_out,), dtype=jnp.float32)
    beta = 0.1 * jax.random.normal(kb, (C_out,), dtype=jnp.float32)

    out = conv1x1_forward(x, weight, gamma, beta)
    out = jax.block_until_ready(out)

    ref = conv1x1_reference(x, weight, gamma, beta)
    np.testing.assert_allclose(np.asarray(out), np.asarray(ref), rtol=1e-4, atol=1e-4)

    print("KERNEL_OK")
</pallas_src>

<mosaic_0001>
module attributes {stable_mosaic.version = 11 : i64} {
  func.func @_stats_kernel(%arg0: i32, %arg1: i32, %arg2: i32, %arg3: memref<1x4x256xf32, #tpu.memory_space<vmem>>, %arg4: memref<1x1x4x4xf32, #tpu.memory_space<vmem>>, %arg5: memref<1x1x4x1xf32, #tpu.memory_space<vmem>>) attributes {dimension_semantics = [#tpu.dimension_semantics<parallel>, #tpu.dimension_semantics<parallel>, #tpu.dimension_semantics<arbitrary>], iteration_bounds = array<i64: 1, 2, 1>, scalar_prefetch = 0 : i64, scratch_operands = 0 : i64, tpu.core_type = #tpu.core_type<tc>, window_params = [{transform_indices = @transform_0, window_bounds = array<i64: 1, 4, 256>}, {transform_indices = @transform_1, window_bounds = array<i64: 1, 1, 4, 4>}, {transform_indices = @transform_2, window_bounds = array<i64: 1, 1, 4, 1>}]} {
    %c0_i32 = arith.constant 0 : i32
    %0 = arith.cmpi eq, %arg2, %c0_i32 : i32
    %1 = arith.extui %0 : i1 to i32
    %c0_i32_0 = arith.constant 0 : i32
    %2 = arith.cmpi ne, %1, %c0_i32_0 : i32
    scf.if %2 {
      %cst_20 = arith.constant 0.000000e+00 : f32
      %20 = vector.broadcast %cst_20 : f32 to vector<4x4xf32>
      %c0_21 = arith.constant 0 : index
      %c0_22 = arith.constant 0 : index
      %c0_23 = arith.constant 0 : index
      %c0_24 = arith.constant 0 : index
      %21 = vector.load %arg4[%c0_21, %c0_22, %c0_23, %c0_24] : memref<1x1x4x4xf32, #tpu.memory_space<vmem>>, vector<1x1x4x4xf32>
      %22 = vector.shape_cast %21 : vector<1x1x4x4xf32> to vector<4x4xf32>
      %23 = vector.shape_cast %20 : vector<4x4xf32> to vector<1x1x4x4xf32>
      tpu.vector_store %arg4[%c0_21, %c0_22, %c0_23, %c0_24], %23 {strides = array<i32>} : memref<1x1x4x4xf32, #tpu.memory_space<vmem>>, vector<1x1x4x4xf32>,
      %cst_25 = arith.constant 0.000000e+00 : f32
      %24 = vector.broadcast %cst_25 : f32 to vector<4x1xf32>
      %c0_26 = arith.constant 0 : index
      %c0_27 = arith.constant 0 : index
      %c0_28 = arith.constant 0 : index
      %c0_29 = arith.constant 0 : index
      %25 = vector.load %arg5[%c0_26, %c0_27, %c0_28, %c0_29] : memref<1x1x4x1xf32, #tpu.memory_space<vmem>>, vector<1x1x4x1xf32>
      %26 = vector.shape_cast %25 : vector<1x1x4x1xf32> to vector<4x1xf32>
      %27 = vector.shape_cast %24 : vector<4x1xf32> to vector<1x1x4x1xf32>
      tpu.vector_store %arg5[%c0_26, %c0_27, %c0_28, %c0_29], %27 {strides = array<i32>} : memref<1x1x4x1xf32, #tpu.memory_space<vmem>>, vector<1x1x4x1xf32>,
    } else {
    }
    %c0 = arith.constant 0 : index
    %c0_1 = arith.constant 0 : index
    %c0_2 = arith.constant 0 : index
    %3 = vector.load %arg3[%c0, %c0_1, %c0_2] : memref<1x4x256xf32, #tpu.memory_space<vmem>>, vector<1x4x256xf32>
    %4 = vector.shape_cast %3 : vector<1x4x256xf32> to vector<4x256xf32>
    %c0_3 = arith.constant 0 : index
    %c0_4 = arith.constant 0 : index
    %c0_5 = arith.constant 0 : index
    %c0_6 = arith.constant 0 : index
    %5 = vector.load %arg4[%c0_3, %c0_4, %c0_5, %c0_6] : memref<1x1x4x4xf32, #tpu.memory_space<vmem>>, vector<1x1x4x4xf32>
    %6 = vector.shape_cast %5 : vector<1x1x4x4xf32> to vector<4x4xf32>
    %cst = arith.constant dense<0.000000e+00> : vector<4x4xf32>
    %7 = tpu.matmul %4, %4, %cst {dimension_numbers = #tpu.dot_dimension_numbers<[1], [1], [0], [0], [0, 0, 1, 0], [], []>} : vector<4x256xf32>, vector<4x256xf32>, vector<4x4xf32> -> vector<4x4xf32>
    %8 = arith.addf %6, %7 : vector<4x4xf32>
    %c0_7 = arith.constant 0 : index
    %c0_8 = arith.constant 0 : index
    %c0_9 = arith.constant 0 : index
    %c0_10 = arith.constant 0 : index
    %9 = vector.load %arg4[%c0_7, %c0_8, %c0_9, %c0_10] : memref<1x1x4x4xf32, #tpu.memory_space<vmem>>, vector<1x1x4x4xf32>
    %10 = vector.shape_cast %9 : vector<1x1x4x4xf32> to vector<4x4xf32>
    %11 = vector.shape_cast %8 : vector<4x4xf32> to vector<1x1x4x4xf32>
    tpu.vector_store %arg4[%c0_7, %c0_8, %c0_9, %c0_10], %11 {strides = array<i32>} : memref<1x1x4x4xf32, #tpu.memory_space<vmem>>, vector<1x1x4x4xf32>,
    %c0_11 = arith.constant 0 : index
    %c0_12 = arith.constant 0 : index
    %c0_13 = arith.constant 0 : index
    %c0_14 = arith.constant 0 : index
    %12 = vector.load %arg5[%c0_11, %c0_12, %c0_13, %c0_14] : memref<1x1x4x1xf32, #tpu.memory_space<vmem>>, vector<1x1x4x1xf32>
    %13 = vector.shape_cast %12 : vector<1x1x4x1xf32> to vector<4x1xf32>
    %cst_15 = arith.constant dense<0.000000e+00> : vector<4xf32>
    %14 = vector.multi_reduction <add>, %4, %cst_15 [1] : vector<4x256xf32> to vector<4xf32>
    %15 = vector.shape_cast %14 : vector<4xf32> to vector<4x1xf32>
    %16 = arith.addf %13, %15 : vector<4x1xf32>
    %c0_16 = arith.constant 0 : index
    %c0_17 = arith.constant 0 : index
    %c0_18 = arith.constant 0 : index
    %c0_19 = arith.constant 0 : index
    %17 = vector.load %arg5[%c0_16, %c0_17, %c0_18, %c0_19] : memref<1x1x4x1xf32, #tpu.memory_space<vmem>>, vector<1x1x4x1xf32>
    %18 = vector.shape_cast %17 : vector<1x1x4x1xf32> to vector<4x1xf32>
    %19 = vector.shape_cast %16 : vector<4x1xf32> to vector<1x1x4x1xf32>
    tpu.vector_store %arg5[%c0_16, %c0_17, %c0_18, %c0_19], %19 {strides = array<i32>} : memref<1x1x4x1xf32, #tpu.memory_space<vmem>>, vector<1x1x4x1xf32>,
    return
  }
  func.func @transform_0(%arg0: i32, %arg1: i32, %arg2: i32) -> (i32, i32, i32) {
    %c1_i32 = arith.constant 1 : i32
    %0 = arith.muli %arg0, %c1_i32 : i32
    %1 = arith.addi %0, %arg2 : i32
    %c0_i32 = arith.constant 0 : i32
    %c0_i32_0 = arith.constant 0 : i32
    return %arg1, %c0_i32, %1 : i32, i32, i32
  }
  func.func @transform_1(%arg0: i32, %arg1: i32, %arg2: i32) -> (i32, i32, i32, i32) {
    %c0_i32 = arith.constant 0 : i32
    %c0_i32_0 = arith.constant 0 : i32
    %c0_i32_1 = arith.constant 0 : i32
    return %arg0, %arg1, %c0_i32, %c0_i32_0 : i32, i32, i32, i32
  }
  func.func @transform_2(%arg0: i32, %arg1: i32, %arg2: i32) -> (i32, i32, i32, i32) {
    %c0_i32 = arith.constant 0 : i32
    %c0_i32_0 = arith.constant 0 : i32
    %c0_i32_1 = arith.constant 0 : i32
    return %arg0, %arg1, %c0_i32, %c0_i32_0 : i32, i32, i32, i32
  }
}

</mosaic_0001>

<llo_original>
// kernel: tpu_custom_call.1
$region0: #{tpu_custom_call.1}
  #allocation0 [shape = 'u32[]', space=smem, size = 0x4, offset = 0x4, fixed_abs, tag = 'smem constant byte address 0x4 - core index']
  #allocation1 [shape = 'u32[72,128]{1,0:T(1,128)}', space=vmem, size = 0x9000, scoped, tag = 'internal scratch']
  %s0 = inlined_call_operand.hbm [shape: f32[2,4,256], index: 0, kind: input, shape index: {}]
  %s1 = inlined_call_operand.hbm [shape: f32[1,2,4,4], index: 1, kind: output, shape index: {0}]
  %s2 = inlined_call_operand.vmem [shape: f32[1,2,4,1], index: 2, kind: output, shape index: {1}]
  %3 = xla_tuple %s1, %s2
  %s4 = sld [smem:[#allocation0]]
  $region53: #{tpu_custom_call.1} parent=0
    _
  %s6 = ssub.s32 1, %s4
  %s7 = scalar_select 0, %s6, %s4
  $region1: #{tpu_custom_call.1} parent=0
    #allocation2 [shape = 'u8[8192]{0}', space=vmem, size = 0x2000, scoped, tag = 'input window, operand 0']
    #allocation3 [shape = 's32[2]{0}', space=sflag, size = 0x8, scoped, tag = 'scoped memory for tpu_custom_call.1']
    #allocation4 [shape = 's32[2]{0}', space=sflag, size = 0x8, scoped, tag = 'scoped memory for tpu_custom_call.1']
    #allocation5 [shape = 'u8[4096]{0}', space=vmem, size = 0x1000, scoped, tag = 'output window, operand 0']
    %8 = vsyncpa [#allocation3], 0
    %s9 = scalar_lea.sflag [#allocation3], 1
    %10 = vsyncpa %s9, 0
    %11 = vsyncpa [#allocation4], 0
    %s12 = scalar_lea.sflag [#allocation4], 1
    %13 = vsyncpa %s12, 0
    loop: start=0, step=1, limit=4
    $region2: #{tpu_custom_call.1} parent=1 // loop_pre_header
      _
    $region3: #{tpu_custom_call.1} parent=1 // loop_header
      %s15 = sphi 0, %s19
      %p16 = scmp.ge.s32.totalorder %s15, 4
      %s22 = sphi 0, %s41
      %s23 = sphi 0, %s37
      %s24 = sphi 0, %s33
      %s25 = sphi 0, %s22
      %s26 = sphi 0, %s23
      %s27 = sphi 0, %s24
      %s28 = sphi 0, %s25
      %s29 = sphi 0, %s26
      %s30 = sphi 0, %s27
      %s48 = sphi 0, %s50
      %s51 = sphi 0, %s48
      %s52 = sphi 0, %s51
      %s68 = sphi 0, %s52
      %s76 = sphi 0, %s78
      %s79 = sphi 0, %s76
      %s80 = sphi 0, %s79
      %s96 = sphi 0, %s80
      %s104 = sphi 0, %s106
      %s107 = sphi 0, %s104
      %s108 = sphi 0, %s107
      %s124 = sphi 0, %s108
    $region4: #{tpu_custom_call.1} parent=1 // loop_header_branch
      %18 = sbr.rel (%p16) target = $region8
    $region5: #{tpu_custom_call.1} parent=1 // loop_body
      %s20 = ssub.s32 %s15, 1
      %s21 = ssub.s32 %s15, 2
      %s31 = sadd.s32 1, %s24
      %p32 = scmp.ge.s32.totalorder %s31, 1
      %s33 = scalar_select %p32, 0, %s31
      %s34 = sadd.s32 1, %s23
      %s35 = scalar_select %p32, %s34, %s23
      %p36 = scmp.ge.s32.totalorder %s35, 2
      %s37 = scalar_select %p36, 0, %s35
      %s38 = sadd.s32 1, %s22
      %s39 = scalar_select %p36, %s38, %s22
      %p40 = scmp.ge.s32.totalorder %s39, 1
      %s41 = scalar_select %p40, 0, %s39
      %s42 = sadd.s32 %s22, %s24
      %s43 = sadd.s32 %s41, %s33
      %s44 = ssub.s32 %s23, %s37
      %s45 = ssub.s32 %s42, %s43
      %s46 = sor.u32 %s44, %s45
      %p47 = scmp.eq.s32.totalorder %s46, 0
      %s49 = sadd.s32 %s48, 1
      %s50 = scalar_select %p47, %s48, %s49
      %p53 = pneg %p47
      %p54 = scmp.eq.s32.totalorder %s15, 1
      %p55 = por %p53, %p54
      %p56 = scmp.ne.s32.totalorder %s48, %s51
      %p57 = scmp.eq.s32.totalorder %s15, 0
      %p58 = por %p56, %p57
      %p59 = scmp.ne.s32.totalorder %s48, %s51
      %p60 = scmp.eq.s32.totalorder %s20, 1
      %p61 = por %p59, %p60
      %p62 = scmp.ne.s32.totalorder %s51, %s52
      %p63 = scmp.eq.s32.totalorder %s20, 0
      %p64 = por %p62, %p63
      %p65 = scmp.ne.s32.totalorder %s51, %s52
      %p66 = scmp.eq.s32.totalorder %s21, 1
      %p67 = por %p65, %p66
      %p69 = scmp.ne.s32.totalorder %s52, %s68
      %p70 = scmp.eq.s32.totalorder %s21, 0
      %p71 = por %p69, %p70
      %s72 = ssub.s32 %s22, %s41
      %s73 = ssub.s32 %s23, %s37
      %s74 = sor.u32 %s72, %s73
      %p75 = scmp.eq.s32.totalorder %s74, 0
      %s77 = sadd.s32 %s76, 1
      %s78 = scalar_select %p75, %s76, %s77
      %p81 = pneg %p75
      %p82 = scmp.eq.s32.totalorder %s15, 1
      %p83 = por %p81, %p82
      %p84 = scmp.ne.s32.totalorder %s76, %s79
      %p85 = scmp.eq.s32.totalorder %s15, 0
      %p86 = por %p84, %p85
      %p87 = scmp.ne.s32.totalorder %s76, %s79
      %p88 = scmp.eq.s32.totalorder %s20, 1
      %p89 = por %p87, %p88
      %p90 = scmp.ne.s32.totalorder %s79, %s80
      %p91 = scmp.eq.s32.totalorder %s20, 0
      %p92 = por %p90, %p91
      %p93 = scmp.ne.s32.totalorder %s79, %s80
      %p94 = scmp.eq.s32.totalorder %s21, 1
      %p95 = por %p93, %p94
      %p97 = scmp.ne.s32.totalorder %s80, %s96
      %p98 = scmp.eq.s32.totalorder %s21, 0
      %p99 = por %p97, %p98
      %s100 = ssub.s32 %s22, %s41
      %s101 = ssub.s32 %s23, %s37
      %s102 = sor.u32 %s100, %s101
      %p103 = scmp.eq.s32.totalorder %s102, 0
      %s105 = sadd.s32 %s104, 1
      %s106 = scalar_select %p103, %s104, %s105
      %p109 = pneg %p103
      %p110 = scmp.eq.s32.totalorder %s15, 1
      %p111 = por %p109, %p110
      %p112 = scmp.ne.s32.totalorder %s104, %s107
      %p113 = scmp.eq.s32.totalorder %s15, 0
      %p114 = por %p112, %p113
      %p115 = scmp.ne.s32.totalorder %s104, %s107
      %p116 = scmp.eq.s32.totalorder %s20, 1
      %p117 = por %p115, %p116
      %p118 = scmp.ne.s32.totalorder %s107, %s108
      %p119 = scmp.eq.s32.totalorder %s20, 0
      %p120 = por %p118, %p119
      %p121 = scmp.ne.s32.totalorder %s107, %s108
      %p122 = scmp.eq.s32.totalorder %s21, 1
      %p123 = por %p121, %p122
      %p125 = scmp.ne.s32.totalorder %s108, %s124
      %p126 = scmp.eq.s32.totalorder %s21, 0
      %p127 = por %p125, %p126
      %p128 = scmp.le.s32.totalorder 1, %s15
      %p129 = scmp.lt.s32.totalorder %s15, 3
      %p130 = pnand %p128, %p129
      %p131 = pneg %p130
      // Predicated region
      $region9: #{tpu_custom_call.1} parent=5 // pred_check
        _
      $region10: #{tpu_custom_call.1} parent=5 // pred_check_branch
        %133 = sbr.rel (%p130) target = $region12
      $region11: #{tpu_custom_call.1} parent=5 // pred_region
        %s134 = ssub.s32 %s15, 1
      $region12: #{tpu_custom_call.1} parent=5 // pred_fallthru
        _
      %p135 = scmp.lt.s32.totalorder %s15, 2
      // Predicated region
      $region13: #{tpu_custom_call.1} parent=5 // pred_check
        %p136 = pneg %p135
      $region14: #{tpu_custom_call.1} parent=5 // pred_check_branch
        %138 = sbr.rel (%p136) target = $region16
      $region15: #{tpu_custom_call.1} parent=5 // pred_region
        // Predicated region
        $region17: #{tpu_custom_call.1} parent=15 // pred_check
          %p139 = pneg %p58
        $region18: #{tpu_custom_call.1} parent=15 // pred_check_branch
          %141 = sbr.rel (%p139) target = $region20
        $region19: #{tpu_custom_call.1} parent=15 // pred_region
          %s142 = sand.u32 %s48, 1
          %s143 = scalar_lea.sflag [#allocation3], %s142
          %s144 = sand.u32 %s48, 1
          %s145 = smul.addr %s144, 8
          %s146 = scalar_lea.vmem [#allocation2], %s145
          %s147 = sadd.s32 %s22, %s24
          %s148 = smul.u32 2, %s147
          %150 = vsyncadd %s143, 0
          %s151 = smul.addr %s23, 2
          %s152 = sadd.s32 %s148, %s151
          %s153 = smul.addr %s152, 4
          %s154 = scalar_lea.hbm %s0, %s153
          %s156 = sshll.u32 %s154, 4
          %s157 = int_to_ptr.hbm [resolvable:$true] %s156
          %s158 = sshll.u32 %s146, 4
          %s159 = int_to_ptr.vmem [resolvable:$true] %s158
          %161 = dma.hbm_to_vmem [thread:$0]  %s157, 128, %s159, %s143
        $region20: #{tpu_custom_call.1} parent=15 // pred_fallthru
          _
      $region16: #{tpu_custom_call.1} parent=5 // pred_fallthru
        _
      %p162 = scmp.le.s32.totalorder 1, %s15
      %p163 = scmp.lt.s32.totalorder %s15, 3
      %p164 = pnand %p162, %p163
      %p165 = pneg %p164
      // Predicated region
      $region21: #{tpu_custom_call.1} parent=5 // pred_check
        _
      $region22: #{tpu_custom_call.1} parent=5 // pred_check_branch
        %167 = sbr.rel (%p164) target = $region24
      $region23: #{tpu_custom_call.1} parent=5 // pred_region
        %s168 = ssub.s32 %s15, 1
        %s169 = sand.u32 %s51, 1
        %s170 = scalar_lea.sflag [#allocation3], %s169
        %s171 = sand.u32 %s51, 1
        %s172 = smul.addr %s171, 8
        %s173 = scalar_lea.vmem [#allocation2], %s172
        // Predicated region
        $region25: #{tpu_custom_call.1} parent=23 // pred_check
          %p174 = pneg %p64
        $region26: #{tpu_custom_call.1} parent=23 // pred_check_branch
          %176 = sbr.rel (%p174) target = $region28
        $region27: #{tpu_custom_call.1} parent=23 // pred_region
          %178 = dma.done %s170, 128
        $region28: #{tpu_custom_call.1} parent=23 // pred_fallthru
          _
        %s179 = sand.u32 %s51, 1
        %s180 = scalar_lea.sflag [#allocation3], %s179
        %s181 = sand.u32 %s51, 1
        %s182 = smul.addr %s181, 8
        %s183 = scalar_lea.vmem [#allocation2], %s182
        %p184 = pneg %p64
        %p185 = pneg %p61
        %p186 = pneg %p92
        %p187 = pneg %p89
        %s188 = sand.u32 %s79, 1
        %s189 = scalar_lea.sflag [#allocation4], %s188
        %s190 = sand.u32 %s79, 1
        %s191 = smul.addr %s190, 4
        %s192 = scalar_lea.vmem [#allocation5], %s191
        %p193 = pneg %p120
        %p194 = pneg %p117
        %p195 = scmp.lt.s32.totalorder %s25, 0
        %s196 = scalar_select %p195, %s25, 0
        %p197 = scmp.lt.s32.totalorder %s26, 1
        %s198 = scalar_select %p197, %s26, 1
        %s199 = smul.addr %s196, 2
        %s200 = sadd.s32 %s198, %s199
        %s201 = smul.addr %s200, 4
        %s202 = scalar_lea.vmem %s2, %s201
        %s203 = sadd.s32 %s25, %s27
        %s204 = smul.u32 2, %s203
        %p205 = scmp.lt.s32.totalorder %s25, 0
        %s206 = scalar_select %p205, %s25, 0
        %p207 = scmp.lt.s32.totalorder %s26, 1
        %s208 = scalar_select %p207, %s26, 1
        %s209 = smul.addr %s206, 2
        %s210 = sadd.s32 %s208, %s209
        %s211 = smul.addr %s210, 4
        %s212 = scalar_lea.vmem %s2, %s211
        %p213 = scmp.eq.s32.totalorder %s27, 0
        // Predicated region
        $region29: #{tpu_custom_call.1} parent=23 // pred_check
          %p214 = pneg %p213
        $region30: #{tpu_custom_call.1} parent=23 // pred_check_branch
          %216 = sbr.rel (%p214) target = $region32
        $region31: #{tpu_custom_call.1} parent=23 // pred_region
          %vm217 = vcmask 27648
          %218 = vst.msk [vmem:[%s192] sm:$0xf] %vm217, 0.0
          %vm219 = vcmask 3072
          %220 = vst.msk [vmem:[%s212] sm:$0xf] %vm219, 0.0
        $region32: #{tpu_custom_call.1} parent=23 // pred_fallthru
          _
        %v221 = vld [vmem:[%s173] sm:$0xff]
        %v222 = vld [vmem:[%s192] sm:$0xf]
        %224 = vst [vmem:[#allocation1] ss:$2 sm:$0xff] %v221
        %v225 = vld.sshfl [vmem:[#allocation1] sm:$0xff pattern:$0x75316420]
        %v226 = vld.sshfl [vmem:[#allocation1 + $0x8] sm:$0xff pattern:$0x75316420]
        %229 = vst [vmem:[#allocation1] ss:$2 sm:$0xff] %v221
        %v230 = vld.sshfl [vmem:[#allocation1] sm:$0xff pattern:$0x75316420]
        %v231 = vld.sshfl [vmem:[#allocation1 + $0x8] sm:$0xff pattern:$0x75316420]
        %234 = vmatpush.xpose.msra.mxu0 0.0
        %235 = vmatpush.xpose.msra.mxu0 0.0
        %236 = vmatpush.xpose.msra.mxu0 0.0
        %237 = vmatpush.xpose.msra.mxu0 0.0
        %238 = vmatpush.xpose.msra.mxu0 0.0
        %239 = vmatpush.xpose.msra.mxu0 0.0
        %240 = vmatpush.xpose.msra.mxu0 0.0
        %241 = vmatpush.xpose.msra.mxu0 0.0
        %242 = vmatpush.xpose.msra.mxu0 0.0
        %243 = vmatpush.xpose.msra.mxu0 0.0
        %244 = vmatpush.xpose.msra.mxu0 0.0
        %245 = vmatpush.xpose.msra.mxu0 0.0
        %246 = vmatpush.xpose.msra.mxu0 0.0
        %247 = vmatpush.xpose.msra.mxu0 0.0
        %248 = vmatpush.xpose.msra.mxu0 0.0
        %249 = vmatpush.xpose.msra.mxu0 %v230
        %250 = vmatmul.f32.gmra.mxu0 %v225
        %v251 = vpop.f32.mrf.mxu0
        %v252 = vadd.f32 0.0, %v251
        %253 = vdwg.mxu0
        %254 = vmatpush.xpose.msra.mxu0 0.0
        %255 = vmatpush.xpose.msra.mxu0 0.0
        %256 = vmatpush.xpose.msra.mxu0 0.0
        %257 = vmatpush.xpose.msra.mxu0 0.0
        %258 = vmatpush.xpose.msra.mxu0 0.0
        %259 = vmatpush.xpose.msra.mxu0 0.0
        %260 = vmatpush.xpose.msra.mxu0 0.0
        %261 = vmatpush.xpose.msra.mxu0 0.0
        %262 = vmatpush.xpose.msra.mxu0 0.0
        %263 = vmatpush.xpose.msra.mxu0 0.0
        %264 = vmatpush.xpose.msra.mxu0 0.0
        %265 = vmatpush.xpose.msra.mxu0 0.0
        %266 = vmatpush.xpose.msra.mxu0 0.0
        %267 = vmatpush.xpose.msra.mxu0 0.0
        %268 = vmatpush.xpose.msra.mxu0 0.0
        %269 = vmatpush.xpose.msra.mxu0 %v231
        %270 = vmatmul.f32.gmra.mxu0 %v226
        %v271 = vpop.f32.mrf.mxu0
        %v272 = vadd.f32 %v252, %v271
        %273 = vdwg.mxu0
        %v274 = vadd.f32 %v222, %v272
        %vm275 = vcmask 27648
        %276 = vst.msk [vmem:[%s192] sm:$0xf] %vm275, %v274
        %v277 = vld [vmem:[%s212] sm:$0xf]
        %278 = vst [vmem:[#allocation1] ss:$2 sm:$0xff] %v221
        %v279 = vld.sshfl [vmem:[#allocation1] sm:$0xff pattern:$0x75316420]
        %v280 = vld.sshfl [vmem:[#allocation1 + $0x8] sm:$0xff pattern:$0x75316420]
        %vm283 = vcmask 1043456
        %v284 = vsel %vm283, %v279, 0.0
        %v285 = vsel %vm283, %v280, 0.0
        %v286 = vadd.f32 %v284, %v285
        %287 = vadd.xlane.f32.xlu0 %v286
        %v288 = vpop.xlane.xlu0 %287
        %v289 = vadd.f32 %v277, %v288
        %vm290 = vcmask 3072
        %291 = vst.msk [vmem:[%s212] sm:$0xf] %vm290, %v289
        %s292 = sand.u32 %s79, 1
        %s293 = scalar_lea.sflag [#allocation4], %s292
        %s294 = sand.u32 %s79, 1
        %s295 = smul.addr %s294, 4
        %s296 = scalar_lea.vmem [#allocation5], %s295
        %p297 = scmp.lt.s32.totalorder %s25, 0
        %s298 = scalar_select %p297, %s25, 0
        %p299 = scmp.lt.s32.totalorder %s26, 1
        %s300 = scalar_select %p299, %s26, 1
        %s301 = smul.addr %s298, 2
        %s302 = sadd.s32 %s300, %s301
        %s303 = smul.addr %s302, 4
        %s304 = scalar_lea.vmem %s2, %s303
        // Predicated region
        $region33: #{tpu_custom_call.1} parent=23 // pred_check
          %p305 = pneg %p89
        $region34: #{tpu_custom_call.1} parent=23 // pred_check_branch
          %307 = sbr.rel (%p305) target = $region36
        $region35: #{tpu_custom_call.1} parent=23 // pred_region
          %309 = vsyncadd %s293, 0
          %s310 = smul.addr %s25, 2
          %s311 = sadd.s32 %s26, %s310
          %s312 = smul.addr %s311, 4
          %s313 = scalar_lea.hbm %s1, %s312
          %s315 = sshll.u32 %s296, 4
          %s316 = int_to_ptr.vmem [resolvable:$true] %s315
          %s317 = sshll.u32 %s313, 4
          %s318 = int_to_ptr.hbm [resolvable:$true] %s317
          %320 = dma.vmem_to_hbm [thread:$0]  %s316, 64, %s318, %s293
        $region36: #{tpu_custom_call.1} parent=23 // pred_fallthru
          _
        // Predicated region
        $region37: #{tpu_custom_call.1} parent=23 // pred_check
          %p321 = pneg %p117
        $region38: #{tpu_custom_call.1} parent=23 // pred_check_branch
          %323 = sbr.rel (%p321) target = $region40
        $region39: #{tpu_custom_call.1} parent=23 // pred_region
          _
        $region40: #{tpu_custom_call.1} parent=23 // pred_fallthru
          _
      $region24: #{tpu_custom_call.1} parent=5 // pred_fallthru
        _
      %p324 = scmp.le.s32.totalorder 2, %s15
      // Predicated region
      $region41: #{tpu_custom_call.1} parent=5 // pred_check
        %p325 = pneg %p324
      $region42: #{tpu_custom_call.1} parent=5 // pred_check_branch
        %327 = sbr.rel (%p325) target = $region44
      $region43: #{tpu_custom_call.1} parent=5 // pred_region
        %s328 = ssub.s32 %s15, 2
        // Predicated region
        $region45: #{tpu_custom_call.1} parent=43 // pred_check
          %p329 = pneg %p95
        $region46: #{tpu_custom_call.1} parent=43 // pred_check_branch
          %331 = sbr.rel (%p329) target = $region48
        $region47: #{tpu_custom_call.1} parent=43 // pred_region
          %s332 = sand.u32 %s80, 1
          %s333 = scalar_lea.sflag [#allocation4], %s332
          %s334 = sand.u32 %s80, 1
          %s335 = smul.addr %s334, 4
          %s336 = scalar_lea.vmem [#allocation5], %s335
          %338 = dma.done %s333, 64
        $region48: #{tpu_custom_call.1} parent=43 // pred_fallthru
          _
        // Predicated region
        $region49: #{tpu_custom_call.1} parent=43 // pred_check
          %p339 = pneg %p123
        $region50: #{tpu_custom_call.1} parent=43 // pred_check_branch
          %341 = sbr.rel (%p339) target = $region52
        $region51: #{tpu_custom_call.1} parent=43 // pred_region
          %p342 = scmp.lt.s32.totalorder %s28, 0
          %s343 = scalar_select %p342, %s28, 0
          %p344 = scmp.lt.s32.totalorder %s29, 1
          %s345 = scalar_select %p344, %s29, 1
          %s346 = smul.addr %s343, 2
          %s347 = sadd.s32 %s345, %s346
          %s348 = smul.addr %s347, 4
          %s349 = scalar_lea.vmem %s2, %s348
        $region52: #{tpu_custom_call.1} parent=43 // pred_fallthru
          _
      $region44: #{tpu_custom_call.1} parent=5 // pred_fallthru
        _
    $region6: #{tpu_custom_call.1} parent=1 // loop_footer
      %s19 = sadd.s32 1, %s15
    $region7: #{tpu_custom_call.1} parent=1 // loop_footer_branch
      %14 = sbr.rel target = $region3
    $region8: #{tpu_custom_call.1} parent=1 // loop_exit
      _
    %350 = vsyncpa [#allocation3], 1
    %s351 = scalar_lea.sflag [#allocation3], 1
    %352 = vsyncpa %s351, 1
    %353 = vsyncpa [#allocation4], 1
    %s354 = scalar_lea.sflag [#allocation4], 1
    %355 = vsyncpa %s354, 1

</llo_original>
